<compile_context>
chip_gen: v7x
topology: tpu7x:2x2x1
jax: 0.10.0
libtpu: 0.0.40
codegen_flags: <defaults>
</compile_context>

<pallas_src>
import functools

import jax
import jax.numpy as jnp
from jax.experimental import pallas as pl
from jax.experimental.pallas import tpu as pltpu


def _round_up(x, m):
    return (x + m - 1) // m * m


def _cdiv(a, b):
    return (a + b - 1) // b


def _pad2d(x, rows, cols):
    pr, pc = rows - x.shape[0], cols - x.shape[1]
    if pr == 0 and pc == 0:
        return x
    return jnp.pad(x, ((0, pr), (0, pc)))


def _gcn_kernel_resident(adj_ref, feat_ref, w1_ref, b1_ref, w2_ref, b2_ref,
                         o_ref, *, compute_dtype):
    # adj_ref  : (tm, Nk_p)      adjacency tile (f32 or bf16; cast in-kernel)
    # feat_ref : (Nk_p, Din_p)   fully VMEM-resident features (compute dtype)
    # w1_ref   : (Din_p, H_p)    f32 gc1 weight (pre-transposed), b1_ref: (1, H_p)
    # w2_ref   : (H_p, Dout_p)   f32 gc2 weight (pre-transposed), b2_ref: (1, Dout_p)
    # o_ref    : (tm, Dout_p)    f32 output tile
    a = adj_ref[...].astype(compute_dtype)
    x = jnp.dot(a, feat_ref[...], preferred_element_type=jnp.float32)
    h = jnp.dot(x, w1_ref[...], preferred_element_type=jnp.float32) + b1_ref[...]
    h = jnp.maximum(h, 0.0)  # ReLU
    y = jnp.dot(h, w2_ref[...], preferred_element_type=jnp.float32) + b2_ref[...]
    o_ref[...] = y.astype(o_ref.dtype)


def _gcn_kernel_ktiled(adj_ref, feat_ref, w1_ref, b1_ref, w2_ref, b2_ref,
                       o_ref, acc_ref, *, compute_dtype):
    # adj_ref  : (tm, tk)        adjacency tile (dominant HBM stream)
    # feat_ref : (tk, Din_p)     feature tile (compute dtype)
    # acc_ref  : (tm, Din_p)     f32 VMEM accumulator for adj @ feats
    k = pl.program_id(1)

    @pl.when(k == 0)
    def _init():
        acc_ref[...] = jnp.zeros_like(acc_ref)

    a = adj_ref[...].astype(compute_dtype)
    acc_ref[...] += jnp.dot(a, feat_ref[...], preferred_element_type=jnp.float32)

    @pl.when(k == pl.num_programs(1) - 1)
    def _epilogue():
        x = acc_ref[...]
        h = jnp.dot(x, w1_ref[...], preferred_element_type=jnp.float32) + b1_ref[...]
        h = jnp.maximum(h, 0.0)  # ReLU
        y = jnp.dot(h, w2_ref[...], preferred_element_type=jnp.float32) + b2_ref[...]
        o_ref[...] = y.astype(o_ref.dtype)


def gcn_forward(adj, feats, w1, b1, w2, b2, *, tm=512, tk=2048,
                compute_dtype=jnp.bfloat16,
                feats_resident_bytes=8 * 1024 * 1024,
                vmem_limit_bytes=None):
    """GCN forward. adj:(N,N) feats:(N,Din) w1:(Din,H) b1:(H,) w2:(H,Dout) b2:(Dout,)."""
    n = adj.shape[0]
    din, hid = w1.shape
    dout = w2.shape[1]

    # Lane-dense padding of every feature dimension (multiples of 128).
    din_p = _round_up(din, 128)
    hid_p = _round_up(hid, 128)
    dout_p = _round_up(dout, 128)

    # Row tile: multiple of 8, clamped to the problem.  Guarantee >= 2 row
    # tiles whenever possible so the "parallel" row axis can split across
    # v7x's two TensorCores.
    tm = max(8, min(tm, _round_up(n, 8)))
    if _cdiv(n, tm) < 2 and n > 8:
        tm = _round_up(_cdiv(n, 2), 8)
    n_row_p = _round_up(n, tm)

    compute_itemsize = jnp.dtype(compute_dtype).itemsize
    n_k_128 = _round_up(n, 128)
    # Feats-resident path: padded feature matrix small enough to keep fully in
    # VMEM -> feats read from HBM exactly once, no K grid axis, no accumulator.
    feats_resident = n_k_128 * din_p * compute_itemsize <= feats_resident_bytes

    if feats_resident:
        n_k_p = n_k_128
    else:
        tk = max(128, min(tk, n_k_128))
        n_k_p = _round_up(n, tk)

    # Pad adjacency rows / K independently.  If no padding is needed we stream
    # the caller's array as-is (f32 or producer-bf16) and cast to the compute
    # dtype inside the kernel -> no extra wrapper-side HBM pass over the
    # dominant stream.  When padding is unavoidable the single pad pass also
    # performs the bf16 cast so the kernel then reads 2 B/elem.
    if (n_row_p, n_k_p) == adj.shape:
        adj_in = adj
    else:
        adj_in = _pad2d(adj, n_row_p, n_k_p).astype(compute_dtype)

    feats_in = _pad2d(feats, n_k_p, din_p).astype(compute_dtype)
    w1_p = _pad2d(w1, din_p, hid_p).astype(jnp.float32)
    b1_p = _pad2d(b1.reshape(1, -1), 1, hid_p).astype(jnp.float32)
    w2_p = _pad2d(w2, hid_p, dout_p).astype(jnp.float32)
    b2_p = _pad2d(b2.reshape(1, -1), 1, dout_p).astype(jnp.float32)

    adj_itemsize = jnp.dtype(adj_in.dtype).itemsize
    feat_itemsize = jnp.dtype(feats_in.dtype).itemsize

    if feats_resident:
        grid = (n_row_p // tm,)
        kernel = functools.partial(_gcn_kernel_resident, compute_dtype=compute_dtype)
        in_specs = [
            pl.BlockSpec((tm, n_k_p), lambda i: (i, 0)),          # adj row tile
            pl.BlockSpec((n_k_p, din_p), lambda i: (0, 0)),       # feats (resident)
            pl.BlockSpec((din_p, hid_p), lambda i: (0, 0)),       # W1
            pl.BlockSpec((1, hid_p), lambda i: (0, 0)),           # b1
            pl.BlockSpec((hid_p, dout_p), lambda i: (0, 0)),      # W2
            pl.BlockSpec((1, dout_p), lambda i: (0, 0)),          # b2
        ]
        out_specs = pl.BlockSpec((tm, dout_p), lambda i: (i, 0))
        scratch_shapes = []
        dims = ("parallel",)
        adj_block_k = n_k_p
    else:
        grid = (n_row_p // tm, n_k_p // tk)
        kernel = functools.partial(_gcn_kernel_ktiled, compute_dtype=compute_dtype)
        in_specs = [
            pl.BlockSpec((tm, tk), lambda i, k: (i, k)),          # adj tile
            pl.BlockSpec((tk, din_p), lambda i, k: (k, 0)),       # feats tile
            pl.BlockSpec((din_p, hid_p), lambda i, k: (0, 0)),    # W1 (grid invariant)
            pl.BlockSpec((1, hid_p), lambda i, k: (0, 0)),        # b1
            pl.BlockSpec((hid_p, dout_p), lambda i, k: (0, 0)),   # W2
            pl.BlockSpec((1, dout_p), lambda i, k: (0, 0)),       # b2
        ]
        out_specs = pl.BlockSpec((tm, dout_p), lambda i, k: (i, 0))
        scratch_shapes = [pltpu.VMEM((tm, din_p), jnp.float32)]
        dims = ("parallel", "arbitrary")
        adj_block_k = tk

    if vmem_limit_bytes is None:
        # Double-buffered inputs/outputs + f32 accumulator (K-tiled only),
        # plus headroom; capped inside v7x's 64 MiB per-TC VMEM.
        est = (2 * tm * adj_block_k * adj_itemsize
               + 2 * adj_block_k * din_p * feat_itemsize
               + 2 * (din_p * hid_p + hid_p * dout_p + hid_p + dout_p) * 4
               + 2 * tm * dout_p * 4
               + (0 if feats_resident else tm * din_p * 4))
        vmem_limit_bytes = int(min(56 * 1024 * 1024,
                                   max(32 * 1024 * 1024, est + 4 * 1024 * 1024)))

    out = pl.pallas_call(
        kernel,
        out_shape=jax.ShapeDtypeStruct((n_row_p, dout_p), jnp.float32),
        grid_spec=pltpu.PrefetchScalarGridSpec(
            num_scalar_prefetch=0,
            grid=grid,
            in_specs=in_specs,
            out_specs=out_specs,
            scratch_shapes=scratch_shapes,
        ),
        compiler_params=pltpu.CompilerParams(
            dimension_semantics=dims,
            vmem_limit_bytes=vmem_limit_bytes,
        ),
    )(adj_in, feats_in, w1_p, b1_p, w2_p, b2_p)

    return out[:n, :dout]


def gcn_reference(adj, feats, w1, b1, w2, b2):
    x = adj @ feats
    x = jnp.maximum(x @ w1 + b1, 0.0)
    return x @ w2 + b2


def _run_case(seed, n, din, hid, dout, **fwd_kwargs):
    key = jax.random.PRNGKey(seed)
    k_adj, k_feat, k_w1, k_b1, k_w2, k_b2 = jax.random.split(key, 6)

    adj = jax.random.uniform(k_adj, (n, n), jnp.float32)
    feats = jax.random.normal(k_feat, (n, din), jnp.float32)

    # nn.Linear-style U(-1/sqrt(fan_in), ...) init; weights pre-transposed to
    # (in_dim, out_dim), biases 1-D.
    lim1 = 1.0 / jnp.sqrt(jnp.float32(din))
    lim2 = 1.0 / jnp.sqrt(jnp.float32(hid))
    w1 = jax.random.uniform(k_w1, (din, hid), jnp.float32, -lim1, lim1)
    b1 = jax.random.uniform(k_b1, (hid,), jnp.float32, -lim1, lim1)
    w2 = jax.random.uniform(k_w2, (hid, dout), jnp.float32, -lim2, lim2)
    b2 = jax.random.uniform(k_b2, (dout,), jnp.float32, -lim2, lim2)

    out = gcn_forward(adj, feats, w1, b1, w2, b2, **fwd_kwargs)
    out = jax.block_until_ready(out)
    assert out.shape == (n, dout)

    with jax.default_matmul_precision("highest"):
        # Tight check: same bf16-quantized adjacency/features, f32 math —
        # validates tiling / accumulation / bias / relu exactly.
        ref_bf16 = gcn_reference(
            adj.astype(jnp.bfloat16).astype(jnp.float32),
            feats.astype(jnp.bfloat16).astype(jnp.float32),
            w1, b1, w2, b2,
        )
        # Loose check vs full-f32 module semantics; deviation bounded by the
        # bf16 quantization of the adjacency/feature stream.
        ref_f32 = gcn_reference(adj, feats, w1, b1, w2, b2)

    assert jnp.allclose(out, ref_bf16, atol=1e-2, rtol=1e-2), \
        "mismatch vs bf16-input reference"
    assert jnp.allclose(out, ref_f32, atol=5e-2, rtol=5e-2), \
        "mismatch vs f32 reference"


if __name__ == "__main__":
    # Demo shapes consistent with the module's forward (small, tile-friendly):
    # feats-resident fast path, 2 row tiles (exercises the parallel axis),
    # adjacency streamed unpadded/uncast straight from HBM.
    _run_case(seed=0, n=256, din=64, hid=128, dout=32)

    # Non-aligned graph size exercising independent row/K padding and the
    # K-tiled accumulator path (forced by disabling the resident fast path).
    _run_case(seed=0, n=200, din=48, hid=96, dout=24,
              feats_resident_bytes=0, tm=128, tk=128)

    print("KERNEL_OK")
</pallas_src>

<mosaic_0001>
module attributes {stable_mosaic.version = 11 : i64} {
  func.func @_gcn_kernel_resident(%arg0: i32, %arg1: memref<128x256xf32, #tpu.memory_space<vmem>>, %arg2: memref<256x128xbf16, #tpu.memory_space<vmem>>, %arg3: memref<128x128xf32, #tpu.memory_space<vmem>>, %arg4: memref<1x128xf32, #tpu.memory_space<vmem>>, %arg5: memref<128x128xf32, #tpu.memory_space<vmem>>, %arg6: memref<1x128xf32, #tpu.memory_space<vmem>>, %arg7: memref<128x128xf32, #tpu.memory_space<vmem>>) attributes {dimension_semantics = [#tpu.dimension_semantics<parallel>], iteration_bounds = array<i64: 2>, scalar_prefetch = 0 : i64, scratch_operands = 0 : i64, tpu.core_type = #tpu.core_type<tc>, window_params = [{transform_indices = @transform_0, window_bounds = array<i64: 128, 256>}, {pipeline_mode = #tpu.pipeline_mode<synchronous>, transform_indices = @transform_1, window_bounds = array<i64: 256, 128>}, {pipeline_mode = #tpu.pipeline_mode<synchronous>, transform_indices = @transform_2, window_bounds = array<i64: 128, 128>}, {pipeline_mode = #tpu.pipeline_mode<synchronous>, transform_indices = @transform_3, window_bounds = array<i64: 1, 128>}, {pipeline_mode = #tpu.pipeline_mode<synchronous>, transform_indices = @transform_4, window_bounds = array<i64: 128, 128>}, {pipeline_mode = #tpu.pipeline_mode<synchronous>, transform_indices = @transform_5, window_bounds = array<i64: 1, 128>}, {transform_indices = @transform_6, window_bounds = array<i64: 128, 128>}]} {
    %c0 = arith.constant 0 : index
    %c0_0 = arith.constant 0 : index
    %0 = vector.load %arg1[%c0, %c0_0] : memref<128x256xf32, #tpu.memory_space<vmem>>, vector<128x256xf32>
    %1 = arith.truncf %0 : vector<128x256xf32> to vector<128x256xbf16>
    %c0_1 = arith.constant 0 : index
    %c0_2 = arith.constant 0 : index
    %2 = vector.load %arg2[%c0_1, %c0_2] : memref<256x128xbf16, #tpu.memory_space<vmem>>, vector<256x128xbf16>
    %cst = arith.constant dense<0.000000e+00> : vector<128x128xf32>
    %3 = tpu.matmul %1, %2, %cst {dimension_numbers = #tpu.dot_dimension_numbers<[1], [0], [0], [1], [0, 0, 1, 1], [], []>} : vector<128x256xbf16>, vector<256x128xbf16>, vector<128x128xf32> -> vector<128x128xf32>
    %c0_3 = arith.constant 0 : index
    %c0_4 = arith.constant 0 : index
    %4 = vector.load %arg3[%c0_3, %c0_4] : memref<128x128xf32, #tpu.memory_space<vmem>>, vector<128x128xf32>
    %cst_5 = arith.constant dense<0.000000e+00> : vector<128x128xf32>
    %5 = tpu.matmul %3, %4, %cst_5 {dimension_numbers = #tpu.dot_dimension_numbers<[1], [0], [0], [1], [0, 0, 1, 1], [], []>} : vector<128x128xf32>, vector<128x128xf32>, vector<128x128xf32> -> vector<128x128xf32>
    %c0_6 = arith.constant 0 : index
    %c0_7 = arith.constant 0 : index
    %6 = vector.load %arg4[%c0_6, %c0_7] : memref<1x128xf32, #tpu.memory_space<vmem>>, vector<1x128xf32>
    %7 = vector.broadcast %6 : vector<1x128xf32> to vector<128x128xf32>
    %8 = arith.addf %5, %7 : vector<128x128xf32>
    %cst_8 = arith.constant 0.000000e+00 : f32
    %9 = vector.broadcast %cst_8 : f32 to vector<128x128xf32>
    %10 = arith.maximumf %8, %9 : vector<128x128xf32>
    %c0_9 = arith.constant 0 : index
    %c0_10 = arith.constant 0 : index
    %11 = vector.load %arg5[%c0_9, %c0_10] : memref<128x128xf32, #tpu.memory_space<vmem>>, vector<128x128xf32>
    %cst_11 = arith.constant dense<0.000000e+00> : vector<128x128xf32>
    %12 = tpu.matmul %10, %11, %cst_11 {dimension_numbers = #tpu.dot_dimension_numbers<[1], [0], [0], [1], [0, 0, 1, 1], [], []>} : vector<128x128xf32>, vector<128x128xf32>, vector<128x128xf32> -> vector<128x128xf32>
    %c0_12 = arith.constant 0 : index
    %c0_13 = arith.constant 0 : index
    %13 = vector.load %arg6[%c0_12, %c0_13] : memref<1x128xf32, #tpu.memory_space<vmem>>, vector<1x128xf32>
    %14 = vector.broadcast %13 : vector<1x128xf32> to vector<128x128xf32>
    %15 = arith.addf %12, %14 : vector<128x128xf32>
    %c0_14 = arith.constant 0 : index
    %c0_15 = arith.constant 0 : index
    %16 = vector.load %arg7[%c0_14, %c0_15] : memref<128x128xf32, #tpu.memory_space<vmem>>, vector<128x128xf32>
    tpu.vector_store %arg7[%c0_14, %c0_15], %15 {strides = array<i32>} : memref<128x128xf32, #tpu.memory_space<vmem>>, vector<128x128xf32>,
    return
  }
  func.func @transform_0(%arg0: i32) -> (i32, i32) {
    %c0_i32 = arith.constant 0 : i32
    %c0_i32_0 = arith.constant 0 : i32
    return %arg0, %c0_i32 : i32, i32
  }
  func.func @transform_1(%arg0: i32) -> (i32, i32) {
    %c0_i32 = arith.constant 0 : i32
    %c0_i32_0 = arith.constant 0 : i32
    %c0_i32_1 = arith.constant 0 : i32
    return %c0_i32, %c0_i32_0 : i32, i32
  }
  func.func @transform_2(%arg0: i32) -> (i32, i32) {
    %c0_i32 = arith.constant 0 : i32
    %c0_i32_0 = arith.constant 0 : i32
    %c0_i32_1 = arith.constant 0 : i32
    return %c0_i32, %c0_i32_0 : i32, i32
  }
  func.func @transform_3(%arg0: i32) -> (i32, i32) {
    %c0_i32 = arith.constant 0 : i32
    %c0_i32_0 = arith.constant 0 : i32
    %c0_i32_1 = arith.constant 0 : i32
    return %c0_i32, %c0_i32_0 : i32, i32
  }
  func.func @transform_4(%arg0: i32) -> (i32, i32) {
    %c0_i32 = arith.constant 0 : i32
    %c0_i32_0 = arith.constant 0 : i32
    %c0_i32_1 = arith.constant 0 : i32
    return %c0_i32, %c0_i32_0 : i32, i32
  }
  func.func @transform_5(%arg0: i32) -> (i32, i32) {
    %c0_i32 = arith.constant 0 : i32
    %c0_i32_0 = arith.constant 0 : i32
    %c0_i32_1 = arith.constant 0 : i32
    return %c0_i32, %c0_i32_0 : i32, i32
  }
  func.func @transform_6(%arg0: i32) -> (i32, i32) {
    %c0_i32 = arith.constant 0 : i32
    %c0_i32_0 = arith.constant 0 : i32
    return %arg0, %c0_i32 : i32, i32
  }
}

</mosaic_0001>

<llo_original>
// kernel: tpu_custom_call.1
$region0: #{tpu_custom_call.1}
  #allocation0 [shape = 'u32[]', space=smem, size = 0x4, offset = 0x4, fixed_abs, tag = 'smem constant byte address 0x4 - core index']
  #allocation1 [shape = 'u32[144,128]{1,0:T(1,128)}', space=vmem, size = 0x12000, scoped, tag = 'internal scratch']
  %s0 = inlined_call_operand.hbm [shape: f32[256,256], index: 0, kind: input, shape index: {}]
  %s1 = inlined_call_operand.hbm [shape: bf16[256,128], index: 1, kind: input, shape index: {}]
  %s2 = inlined_call_operand.hbm [shape: f32[128,128], index: 2, kind: input, shape index: {}]
  %s3 = inlined_call_operand.vmem [shape: f32[1,128], index: 3, kind: input, shape index: {}]
  %s4 = inlined_call_operand.hbm [shape: f32[128,128], index: 4, kind: input, shape index: {}]
  %s5 = inlined_call_operand.vmem [shape: f32[1,128], index: 5, kind: input, shape index: {}]
  %s6 = inlined_call_operand.hbm [shape: f32[256,128], index: 6, kind: output, shape index: {}]
  %s7 = sld [smem:[#allocation0]]
  $region73: #{tpu_custom_call.1} parent=0
    _
  %s9 = ssub.s32 1, %s7
  %s10 = scalar_select 0, %s9, %s7
  $region1: #{tpu_custom_call.1} parent=0
    #allocation2 [shape = 'u8[262144]{0}', space=vmem, size = 0x40000, scoped, tag = 'input window, operand 0']
    #allocation3 [shape = 's32[2]{0}', space=sflag, size = 0x8, scoped, tag = 'scoped memory for tpu_custom_call.1']
    #allocation4 [shape = 's32[2]{0}', space=sflag, size = 0x8, scoped, tag = 'scoped memory for tpu_custom_call.1']
    #allocation5 [shape = 'u8[65536]{0}', space=vmem, size = 0x10000, scoped, tag = 'input window, operand 1, single buffered']
    #allocation6 [shape = 's32[1]{0}', space=sflag, size = 0x4, scoped, tag = 'scoped memory for tpu_custom_call.1']
    #allocation7 [shape = 'u8[65536]{0}', space=vmem, size = 0x10000, scoped, tag = 'input window, operand 2, single buffered']
    #allocation8 [shape = 'u8[65536]{0}', space=vmem, size = 0x10000, scoped, tag = 'input window, operand 4, single buffered']
    #allocation9 [shape = 's32[1]{0}', space=sflag, size = 0x4, scoped, tag = 'scoped memory for tpu_custom_call.1']
    #allocation10 [shape = 'u8[131072]{0}', space=vmem, size = 0x20000, scoped, tag = 'output window, operand 0']
    %11 = vsyncpa [#allocation3], 0
    %s12 = scalar_lea.sflag [#allocation3], 1
    %13 = vsyncpa %s12, 0
    %14 = vsyncpa [#allocation6], 0
    %15 = vsyncpa [#allocation9], 0
    %16 = vsyncpa [#allocation4], 0
    %s17 = scalar_lea.sflag [#allocation4], 1
    %18 = vsyncpa %s17, 0
    loop: start=0, step=1, limit=4
    $region2: #{tpu_custom_call.1} parent=1 // loop_pre_header
      _
    $region3: #{tpu_custom_call.1} parent=1 // loop_header
      %s20 = sphi 0, %s24
      %p21 = scmp.ge.s32.totalorder %s20, 4
      %s30 = sphi 0, %s32
      %s33 = sphi 0, %s30
      %s34 = sphi 0, %s33
      %s50 = sphi 0, %s34
      %s54 = sphi 0, %s54
      %s56 = sphi 0, %s54
      %s57 = sphi 0, %s56
      %s71 = sphi 0, %s57
      %s75 = sphi 0, %s75
      %s77 = sphi 0, %s75
      %s78 = sphi 0, %s77
      %s92 = sphi 0, %s78
      %s96 = sphi 0, %s96
      %s98 = sphi 0, %s96
      %s99 = sphi 0, %s98
      %s113 = sphi 0, %s99
      %s117 = sphi 0, %s117
      %s119 = sphi 0, %s117
      %s120 = sphi 0, %s119
      %s134 = sphi 0, %s120
      %s138 = sphi 0, %s138
      %s140 = sphi 0, %s138
      %s141 = sphi 0, %s140
      %s155 = sphi 0, %s141
      %s161 = sphi 0, %s163
      %s164 = sphi 0, %s161
      %s165 = sphi 0, %s164
      %s181 = sphi 0, %s165
    $region4: #{tpu_custom_call.1} parent=1 // loop_header_branch
      %23 = sbr.rel (%p21) target = $region8
    $region5: #{tpu_custom_call.1} parent=1 // loop_body
      %s25 = ssub.s32 %s20, 1
      %s26 = ssub.s32 %s20, 2
      %s27 = sadd.s32 %s20, 1
      %s28 = ssub.s32 %s20, %s27
      %p29 = scmp.eq.s32.totalorder %s28, 0
      %s31 = sadd.s32 %s30, 1
      %s32 = scalar_select %p29, %s30, %s31
      %p35 = pneg %p29
      %p36 = scmp.eq.s32.totalorder %s20, 1
      %p37 = por %p35, %p36
      %p38 = scmp.ne.s32.totalorder %s30, %s33
      %p39 = scmp.eq.s32.totalorder %s20, 0
      %p40 = por %p38, %p39
      %p41 = scmp.ne.s32.totalorder %s30, %s33
      %p42 = scmp.eq.s32.totalorder %s25, 1
      %p43 = por %p41, %p42
      %p44 = scmp.ne.s32.totalorder %s33, %s34
      %p45 = scmp.eq.s32.totalorder %s25, 0
      %p46 = por %p44, %p45
      %p47 = scmp.ne.s32.totalorder %s33, %s34
      %p48 = scmp.eq.s32.totalorder %s26, 1
      %p49 = por %p47, %p48
      %p51 = scmp.ne.s32.totalorder %s34, %s50
      %p52 = scmp.eq.s32.totalorder %s26, 0
      %p53 = por %p51, %p52
      %s55 = sadd.s32 %s54, 1
      %p58 = scmp.eq.s32.totalorder %s20, 1
      %p59 = scmp.ne.s32.totalorder %s54, %s56
      %p60 = scmp.eq.s32.totalorder %s20, 0
      %p61 = por %p59, %p60
      %p62 = scmp.ne.s32.totalorder %s54, %s56
      %p63 = scmp.eq.s32.totalorder %s25, 1
      %p64 = por %p62, %p63
      %p65 = scmp.ne.s32.totalorder %s56, %s57
      %p66 = scmp.eq.s32.totalorder %s25, 0
      %p67 = por %p65, %p66
      %p68 = scmp.ne.s32.totalorder %s56, %s57
      %p69 = scmp.eq.s32.totalorder %s26, 1
      %p70 = por %p68, %p69
      %p72 = scmp.ne.s32.totalorder %s57, %s71
      %p73 = scmp.eq.s32.totalorder %s26, 0
      %p74 = por %p72, %p73
      %s76 = sadd.s32 %s75, 1
      %p79 = scmp.eq.s32.totalorder %s20, 1
      %p80 = scmp.ne.s32.totalorder %s75, %s77
      %p81 = scmp.eq.s32.totalorder %s20, 0
      %p82 = por %p80, %p81
      %p83 = scmp.ne.s32.totalorder %s75, %s77
      %p84 = scmp.eq.s32.totalorder %s25, 1
      %p85 = por %p83, %p84
      %p86 = scmp.ne.s32.totalorder %s77, %s78
      %p87 = scmp.eq.s32.totalorder %s25, 0
      %p88 = por %p86, %p87
      %p89 = scmp.ne.s32.totalorder %s77, %s78
      %p90 = scmp.eq.s32.totalorder %s26, 1
      %p91 = por %p89, %p90
      %p93 = scmp.ne.s32.totalorder %s78, %s92
      %p94 = scmp.eq.s32.totalorder %s26, 0
      %p95 = por %p93, %p94
      %s97 = sadd.s32 %s96, 1
      %p100 = scmp.eq.s32.totalorder %s20, 1
      %p101 = scmp.ne.s32.totalorder %s96, %s98
      %p102 = scmp.eq.s32.totalorder %s20, 0
      %p103 = por %p101, %p102
      %p104 = scmp.ne.s32.totalorder %s96, %s98
      %p105 = scmp.eq.s32.totalorder %s25, 1
      %p106 = por %p104, %p105
      %p107 = scmp.ne.s32.totalorder %s98, %s99
      %p108 = scmp.eq.s32.totalorder %s25, 0
      %p109 = por %p107, %p108
      %p110 = scmp.ne.s32.totalorder %s98, %s99
      %p111 = scmp.eq.s32.totalorder %s26, 1
      %p112 = por %p110, %p111
      %p114 = scmp.ne.s32.totalorder %s99, %s113
      %p115 = scmp.eq.s32.totalorder %s26, 0
      %p116 = por %p114, %p115
      %s118 = sadd.s32 %s117, 1
      %p121 = scmp.eq.s32.totalorder %s20, 1
      %p122 = scmp.ne.s32.totalorder %s117, %s119
      %p123 = scmp.eq.s32.totalorder %s20, 0
      %p124 = por %p122, %p123
      %p125 = scmp.ne.s32.totalorder %s117, %s119
      %p126 = scmp.eq.s32.totalorder %s25, 1
      %p127 = por %p125, %p126
      %p128 = scmp.ne.s32.totalorder %s119, %s120
      %p129 = scmp.eq.s32.totalorder %s25, 0
      %p130 = por %p128, %p129
      %p131 = scmp.ne.s32.totalorder %s119, %s120
      %p132 = scmp.eq.s32.totalorder %s26, 1
      %p133 = por %p131, %p132
      %p135 = scmp.ne.s32.totalorder %s120, %s134
      %p136 = scmp.eq.s32.totalorder %s26, 0
      %p137 = por %p135, %p136
      %s139 = sadd.s32 %s138, 1
      %p142 = scmp.eq.s32.totalorder %s20, 1
      %p143 = scmp.ne.s32.totalorder %s138, %s140
      %p144 = scmp.eq.s32.totalorder %s20, 0
      %p145 = por %p143, %p144
      %p146 = scmp.ne.s32.totalorder %s138, %s140
      %p147 = scmp.eq.s32.totalorder %s25, 1
      %p148 = por %p146, %p147
      %p149 = scmp.ne.s32.totalorder %s140, %s141
      %p150 = scmp.eq.s32.totalorder %s25, 0
      %p151 = por %p149, %p150
      %p152 = scmp.ne.s32.totalorder %s140, %s141
      %p153 = scmp.eq.s32.totalorder %s26, 1
      %p154 = por %p152, %p153
      %p156 = scmp.ne.s32.totalorder %s141, %s155
      %p157 = scmp.eq.s32.totalorder %s26, 0
      %p158 = por %p156, %p157
      %s159 = ssub.s32 %s20, %s27
      %p160 = scmp.eq.s32.totalorder %s159, 0
      %s162 = sadd.s32 %s161, 1
      %s163 = scalar_select %p160, %s161, %s162
      %p166 = pneg %p160
      %p167 = scmp.eq.s32.totalorder %s20, 1
      %p168 = por %p166, %p167
      %p169 = scmp.ne.s32.totalorder %s161, %s164
      %p170 = scmp.eq.s32.totalorder %s20, 0
      %p171 = por %p169, %p170
      %p172 = scmp.ne.s32.totalorder %s161, %s164
      %p173 = scmp.eq.s32.totalorder %s25, 1
      %p174 = por %p172, %p173
      %p175 = scmp.ne.s32.totalorder %s164, %s165
      %p176 = scmp.eq.s32.totalorder %s25, 0
      %p177 = por %p175, %p176
      %p178 = scmp.ne.s32.totalorder %s164, %s165
      %p179 = scmp.eq.s32.totalorder %s26, 1
      %p180 = por %p178, %p179
      %p182 = scmp.ne.s32.totalorder %s165, %s181
      %p183 = scmp.eq.s32.totalorder %s26, 0
      %p184 = por %p182, %p183
      %p185 = scmp.le.s32.totalorder 1, %s20
      %p186 = scmp.lt.s32.totalorder %s20, 3
      %p187 = pnand %p185, %p186
      %p188 = pneg %p187
      // Predicated region
      $region9: #{tpu_custom_call.1} parent=5 // pred_check
        _
      $region10: #{tpu_custom_call.1} parent=5 // pred_check_branch
        %190 = sbr.rel (%p187) target = $region12
      $region11: #{tpu_custom_call.1} parent=5 // pred_region
        %s191 = ssub.s32 %s20, 1
        // Predicated region
        $region13: #{tpu_custom_call.1} parent=11 // pred_check
          %p192 = pneg %p67
        $region14: #{tpu_custom_call.1} parent=11 // pred_check_branch
          %194 = sbr.rel (%p192) target = $region16
        $region15: #{tpu_custom_call.1} parent=11 // pred_region
          %s196 = ssub.s32 2048, 2048
          %197 = vsyncadd [#allocation6], %s196
          %s198 = sshll.u32 [#allocation5], 4
          %s199 = int_to_ptr.vmem [resolvable:$true] %s198
          %204 = dma.hbm_to_vmem [thread:$0]  %s1, 2048, %s199, [#allocation6], 64, 64, 4
        $region16: #{tpu_custom_call.1} parent=11 // pred_fallthru
          _
        // Predicated region
        $region17: #{tpu_custom_call.1} parent=11 // pred_check
          %p205 = pneg %p88
        $region18: #{tpu_custom_call.1} parent=11 // pred_check_branch
          %207 = sbr.rel (%p205) target = $region20
        $region19: #{tpu_custom_call.1} parent=11 // pred_region
          %s209 = ssub.s32 2048, 2048
          %210 = vsyncadd [#allocation6], %s209
          %s211 = sshll.u32 [#allocation7], 4
          %s212 = int_to_ptr.vmem [resolvable:$true] %s211
          %217 = dma.hbm_to_vmem [thread:$0]  %s2, 2048, %s212, [#allocation6], 128, 128, 8
        $region20: #{tpu_custom_call.1} parent=11 // pred_fallthru
          _
        // Predicated region
        $region21: #{tpu_custom_call.1} parent=11 // pred_check
          %p218 = pneg %p109
        $region22: #{tpu_custom_call.1} parent=11 // pred_check_branch
          %220 = sbr.rel (%p218) target = $region24
        $region23: #{tpu_custom_call.1} parent=11 // pred_region
          _
        $region24: #{tpu_custom_call.1} parent=11 // pred_fallthru
          _
        // Predicated region
        $region25: #{tpu_custom_call.1} parent=11 // pred_check
          %p221 = pneg %p130
        $region26: #{tpu_custom_call.1} parent=11 // pred_check_branch
          %223 = sbr.rel (%p221) target = $region28
        $region27: #{tpu_custom_call.1} parent=11 // pred_region
          %s225 = ssub.s32 2048, 2048
          %226 = vsyncadd [#allocation9], %s225
          %s227 = sshll.u32 [#allocation8], 4
          %s228 = int_to_ptr.vmem [resolvable:$true] %s227
          %233 = dma.hbm_to_vmem [thread:$0]  %s4, 2048, %s228, [#allocation9], 128, 128, 8
        $region28: #{tpu_custom_call.1} parent=11 // pred_fallthru
          _
        // Predicated region
        $region29: #{tpu_custom_call.1} parent=11 // pred_check
          %p234 = pneg %p151
        $region30: #{tpu_custom_call.1} parent=11 // pred_check_branch
          %236 = sbr.rel (%p234) target = $region32
        $region31: #{tpu_custom_call.1} parent=11 // pred_region
          _
        $region32: #{tpu_custom_call.1} parent=11 // pred_fallthru
          _
      $region12: #{tpu_custom_call.1} parent=5 // pred_fallthru
        _
      %p237 = scmp.lt.s32.totalorder %s20, 2
      // Predicated region
      $region33: #{tpu_custom_call.1} parent=5 // pred_check
        %p238 = pneg %p237
      $region34: #{tpu_custom_call.1} parent=5 // pred_check_branch
        %240 = sbr.rel (%p238) target = $region36
      $region35: #{tpu_custom_call.1} parent=5 // pred_region
        // Predicated region
        $region37: #{tpu_custom_call.1} parent=35 // pred_check
          %p241 = pneg %p40
        $region38: #{tpu_custom_call.1} parent=35 // pred_check_branch
          %243 = sbr.rel (%p241) target = $region40
        $region39: #{tpu_custom_call.1} parent=35 // pred_region
          %s244 = sand.u32 %s30, 1
          %s245 = scalar_lea.sflag [#allocation3], %s244
          %s246 = sand.u32 %s30, 1
          %s247 = smul.addr %s246, 256
          %s248 = scalar_lea.vmem [#allocation2], %s247
          %s249 = smul.u32 16, %s20
          %s251 = ssub.s32 4096, 4096
          %252 = vsyncadd %s245, %s251
          %s253 = smul.addr %s249, 2
          %s254 = smul.addr %s253, 128
          %s255 = scalar_lea.hbm %s0, %s254
          %s256 = sshll.u32 %s248, 4
          %s257 = int_to_ptr.vmem [resolvable:$true] %s256
          %262 = dma.hbm_to_vmem [thread:$0]  %s255, 4096, %s257, %s245, 256, 256, 16
        $region40: #{tpu_custom_call.1} parent=35 // pred_fallthru
          _
      $region36: #{tpu_custom_call.1} parent=5 // pred_fallthru
        _
      %p263 = scmp.le.s32.totalorder 1, %s20
      %p264 = scmp.lt.s32.totalorder %s20, 3
      %p265 = pnand %p263, %p264
      %p266 = pneg %p265
      // Predicated region
      $region41: #{tpu_custom_call.1} parent=5 // pred_check
        _
      $region42: #{tpu_custom_call.1} parent=5 // pred_check_branch
        %268 = sbr.rel (%p265) target = $region44
      $region43: #{tpu_custom_call.1} parent=5 // pred_region
        %s269 = ssub.s32 %s20, 1
        %s270 = sand.u32 %s33, 1
        %s271 = scalar_lea.sflag [#allocation3], %s270
        %s272 = sand.u32 %s33, 1
        %s273 = smul.addr %s272, 256
        %s274 = scalar_lea.vmem [#allocation2], %s273
        // Predicated region
        $region45: #{tpu_custom_call.1} parent=43 // pred_check
          %p275 = pneg %p46
        $region46: #{tpu_custom_call.1} parent=43 // pred_check_branch
          %277 = sbr.rel (%p275) target = $region48
        $region47: #{tpu_custom_call.1} parent=43 // pred_region
          %278 = dma.done %s271, 4096
        $region48: #{tpu_custom_call.1} parent=43 // pred_fallthru
          _
        // Predicated region
        $region49: #{tpu_custom_call.1} parent=43 // pred_check
          %p279 = pneg %p67
        $region50: #{tpu_custom_call.1} parent=43 // pred_check_branch
          %281 = sbr.rel (%p279) target = $region52
        $region51: #{tpu_custom_call.1} parent=43 // pred_region
          %282 = dma.done [#allocation6], 2048
        $region52: #{tpu_custom_call.1} parent=43 // pred_fallthru
          _
        // Predicated region
        $region53: #{tpu_custom_call.1} parent=43 // pred_check
          %p283 = pneg %p88
        $region54: #{tpu_custom_call.1} parent=43 // pred_check_branch
          %285 = sbr.rel (%p283) target = $region56
        $region55: #{tpu_custom_call.1} parent=43 // pred_region
          %286 = dma.done [#allocation6], 2048
        $region56: #{tpu_custom_call.1} parent=43 // pred_fallthru
          _
        // Predicated region
        $region57: #{tpu_custom_call.1} parent=43 // pred_check
          %p287 = pneg %p130
        $region58: #{tpu_custom_call.1} parent=43 // pred_check_branch
          %289 = sbr.rel (%p287) target = $region60
        $region59: #{tpu_custom_call.1} parent=43 // pred_region
          %290 = dma.done [#allocation9], 2048
        $region60: #{tpu_custom_call.1} parent=43 // pred_fallthru
          _
        %s291 = sand.u32 %s33, 1
        %s292 = scalar_lea.sflag [#allocation3], %s291
        %s293 = sand.u32 %s33, 1
        %s294 = smul.addr %s293, 256
        %s295 = scalar_lea.vmem [#allocation2], %s294
        %p296 = pneg %p46
        %p297 = pneg %p43
        %p298 = pneg %p67
        %p299 = pneg %p64
        %p300 = pneg %p88
        %p301 = pneg %p85
        %p302 = pneg %p109
        %p303 = pneg %p106
        %p304 = pneg %p130
        %p305 = pneg %p127
        %p306 = pneg %p151
        %p307 = pneg %p148
        %p308 = pneg %p177
        %p309 = pneg %p174
        %s310 = sand.u32 %s164, 1
        %s311 = scalar_lea.sflag [#allocation4], %s310
        %s312 = sand.u32 %s164, 1
        %s313 = smul.addr %s312, 128
        %s314 = scalar_lea.vmem [#allocation10], %s313
        %s315 = smul.u32 16, %s25
        %s316 = smul.u32 16, %s25
        %v318 = vld [vmem:[%s274] sm:$0xff]
        %v319 = vld [vmem:[%s274 + $0x8] sm:$0xff]
        %v320 = vld [vmem:[%s274 + $0x10] sm:$0xff]
        %v321 = vld [vmem:[%s274 + $0x18] sm:$0xff]
        %v322 = vld [vmem:[%s274 + $0x20] sm:$0xff]
        %v323 = vld [vmem:[%s274 + $0x28] sm:$0xff]
        %v324 = vld [vmem:[%s274 + $0x30] sm:$0xff]
        %v325 = vld [vmem:[%s274 + $0x38] sm:$0xff]
        %v326 = vld [vmem:[%s274 + $0x40] sm:$0xff]
        %v327 = vld [vmem:[%s274 + $0x48] sm:$0xff]
        %v328 = vld [vmem:[%s274 + $0x50] sm:$0xff]
        %v329 = vld [vmem:[%s274 + $0x58] sm:$0xff]
        %v330 = vld [vmem:[%s274 + $0x60] sm:$0xff]
        %v331 = vld [vmem:[%s274 + $0x68] sm:$0xff]
        %v332 = vld [vmem:[%s274 + $0x70] sm:$0xff]
        %v333 = vld [vmem:[%s274 + $0x78] sm:$0xff]
        %v334 = vld [vmem:[%s274 + $0x80] sm:$0xff]
        %v335 = vld [vmem:[%s274 + $0x88] sm:$0xff]
        %v336 = vld [vmem:[%s274 + $0x90] sm:$0xff]
        %v337 = vld [vmem:[%s274 + $0x98] sm:$0xff]
        %v338 = vld [vmem:[%s274 + $0xa0] sm:$0xff]
        %v339 = vld [vmem:[%s274 + $0xa8] sm:$0xff]
        %v340 = vld [vmem:[%s274 + $0xb0] sm:$0xff]
        %v341 = vld [vmem:[%s274 + $0xb8] sm:$0xff]
        %v342 = vld [vmem:[%s274 + $0xc0] sm:$0xff]
        %v343 = vld [vmem:[%s274 + $0xc8] sm:$0xff]
        %v344 = vld [vmem:[%s274 + $0xd0] sm:$0xff]
        %v345 = vld [vmem:[%s274 + $0xd8] sm:$0xff]
        %v346 = vld [vmem:[%s274 + $0xe0] sm:$0xff]
        %v347 = vld [vmem:[%s274 + $0xe8] sm:$0xff]
        %v348 = vld [vmem:[%s274 + $0xf0] sm:$0xff]
        %v349 = vld [vmem:[%s274 + $0xf8] sm:$0xff]
        %v350 = vpack.c.bf16 %v320, %v318
        %v351 = vpack.c.bf16 %v321, %v319
        %v352 = vpack.c.bf16 %v324, %v322
        %v353 = vpack.c.bf16 %v325, %v323
        %v354 = vpack.c.bf16 %v328, %v326
        %v355 = vpack.c.bf16 %v329, %v327
        %v356 = vpack.c.bf16 %v332, %v330
        %v357 = vpack.c.bf16 %v333, %v331
        %v358 = vpack.c.bf16 %v336, %v334
        %v359 = vpack.c.bf16 %v337, %v335
        %v360 = vpack.c.bf16 %v340, %v338
        %v361 = vpack.c.bf16 %v341, %v339
        %v362 = vpack.c.bf16 %v344, %v342
        %v363 = vpack.c.bf16 %v345, %v343
        %v364 = vpack.c.bf16 %v348, %v346
        %v365 = vpack.c.bf16 %v349, %v347
        %v366 = vld [vmem:[#allocation5] sm:$0xf]
        %v367 = vld [vmem:[#allocation5 + $0x4] sm:$0xf]
        %v368 = vld [vmem:[#allocation5 + $0x8] sm:$0xf]
        %v369 = vld [vmem:[#allocation5 + $0xc] sm:$0xf]
        %v370 = vld [vmem:[#allocation5 + $0x10] sm:$0xf]
        %v371 = vld [vmem:[#allocation5 + $0x14] sm:$0xf]
        %v372 = vld [vmem:[#allocation5 + $0x18] sm:$0xf]
        %v373 = vld [vmem:[#allocation5 + $0x1c] sm:$0xf]
        %v374 = vld [vmem:[#allocation5 + $0x20] sm:$0xf]
        %v375 = vld [vmem:[#allocation5 + $0x24] sm:$0xf]
        %v376 = vld [vmem:[#allocation5 + $0x28] sm:$0xf]
        %v377 = vld [vmem:[#allocation5 + $0x2c] sm:$0xf]
        %v378 = vld [vmem:[#allocation5 + $0x30] sm:$0xf]
        %v379 = vld [vmem:[#allocation5 + $0x34] sm:$0xf]
        %v380 = vld [vmem:[#allocation5 + $0x38] sm:$0xf]
        %v381 = vld [vmem:[#allocation5 + $0x3c] sm:$0xf]
        %v382 = vld [vmem:[#allocation5 + $0x40] sm:$0xf]
        %v383 = vld [vmem:[#allocation5 + $0x44] sm:$0xf]
        %v384 = vld [vmem:[#allocation5 + $0x48] sm:$0xf]
        %v385 = vld [vmem:[#allocation5 + $0x4c] sm:$0xf]
        %v386 = vld [vmem:[#allocation5 + $0x50] sm:$0xf]
        %v387 = vld [vmem:[#allocation5 + $0x54] sm:$0xf]
        %v388 = vld [vmem:[#allocation5 + $0x58] sm:$0xf]
        %v389 = vld [vmem:[#allocation5 + $0x5c] sm:$0xf]
        %v390 = vld [vmem:[#allocation5 + $0x60] sm:$0xf]
        %v391 = vld [vmem:[#allocation5 + $0x64] sm:$0xf]
        %v392 = vld [vmem:[#allocation5 + $0x68] sm:$0xf]
        %v393 = vld [vmem:[#allocation5 + $0x6c] sm:$0xf]
        %v394 = vld [vmem:[#allocation5 + $0x70] sm:$0xf]
        %v395 = vld [vmem:[#allocation5 + $0x74] sm:$0xf]
        %v396 = vld [vmem:[#allocation5 + $0x78] sm:$0xf]
        %v397 = vld [vmem:[#allocation5 + $0x7c] sm:$0xf]
        %v430 = vunpack.c.l.b16 %v366
        %v431 = vunpack.c.l.b16 %v367
        %v432 = vunpack.c.l.b16 %v368
        %v433 = vunpack.c.l.b16 %v369
        %v434 = vunpack.c.l.b16 %v370
        %v435 = vunpack.c.l.b16 %v371
        %v436 = vunpack.c.l.b16 %v372
        %v437 = vunpack.c.l.b16 %v373
        %v438 = vunpack.c.l.b16 %v374
        %v439 = vunpack.c.l.b16 %v375
        %v440 = vunpack.c.l.b16 %v376
        %v441 = vunpack.c.l.b16 %v377
        %v442 = vunpack.c.l.b16 %v378
        %v443 = vunpack.c.l.b16 %v379
        %v444 = vunpack.c.l.b16 %v380
        %v445 = vunpack.c.l.b16 %v381
        %v446 = vunpack.c.l.b16 %v382
        %v447 = vunpack.c.l.b16 %v383
        %v448 = vunpack.c.l.b16 %v384
        %v449 = vunpack.c.l.b16 %v385
        %v450 = vunpack.c.l.b16 %v386
        %v451 = vunpack.c.l.b16 %v387
        %v452 = vunpack.c.l.b16 %v388
        %v453 = vunpack.c.l.b16 %v389
        %v454 = vunpack.c.l.b16 %v390
        %v455 = vunpack.c.l.b16 %v391
        %v456 = vunpack.c.l.b16 %v392
        %v457 = vunpack.c.l.b16 %v393
        %v458 = vunpack.c.l.b16 %v394
        %v459 = vunpack.c.l.b16 %v395
        %v460 = vunpack.c.l.b16 %v396
        %v461 = vunpack.c.l.b16 %v397
        %v462 = vpack.c.b16 %v431, %v430
        %v463 = vpack.c.b16 %v433, %v432
        %v464 = vpack.c.b16 %v435, %v434
        %v465 = vpack.c.b16 %v437, %v436
        %v466 = vpack.c.b16 %v439, %v438
        %v467 = vpack.c.b16 %v441, %v440
        %v468 = vpack.c.b16 %v443, %v442
        %v469 = vpack.c.b16 %v445, %v444
        %v470 = vpack.c.b16 %v447, %v446
        %v471 = vpack.c.b16 %v449, %v448
        %v472 = vpack.c.b16 %v451, %v450
        %v473 = vpack.c.b16 %v453, %v452
        %v474 = vpack.c.b16 %v455, %v454
        %v475 = vpack.c.b16 %v457, %v456
        %v476 = vpack.c.b16 %v459, %v458
        %v477 = vpack.c.b16 %v461, %v460
        %494 = vmatprep.subr.bf16.mxu0 0
        %495 = vmatpush1.bf16.msra.mxu0 %v462
        %496 = vmatprep.subr.bf16.mxu0 0
        %497 = vmatpush1.bf16.msra.mxu0 %v463
        %498 = vmatprep.subr.bf16.mxu0 0
        %499 = vmatpush1.bf16.msra.mxu0 %v464
        %500 = vmatprep.subr.bf16.mxu0 0
        %501 = vmatpush1.bf16.msra.mxu0 %v465
        %502 = vmatprep.subr.bf16.mxu0 0
        %503 = vmatpush1.bf16.msra.mxu0 %v466
        %504 = vmatprep.subr.bf16.mxu0 0
        %505 = vmatpush1.bf16.msra.mxu0 %v467
        %506 = vmatprep.subr.bf16.mxu0 0
        %507 = vmatpush1.bf16.msra.mxu0 %v468
        %508 = vmatprep.subr.bf16.mxu0 0
        %509 = vmatpush1.bf16.msra.mxu0 %v469
        %510 = vmatprep.subr.bf16.mxu0 0
        %511 = vmatpush1.bf16.msra.mxu0 %v470
        %512 = vmatprep.subr.bf16.mxu0 0
        %513 = vmatpush1.bf16.msra.mxu0 %v471
        %514 = vmatprep.subr.bf16.mxu0 0
        %515 = vmatpush1.bf16.msra.mxu0 %v472
        %516 = vmatprep.subr.bf16.mxu0 0
        %517 = vmatpush1.bf16.msra.mxu0 %v473
        %518 = vmatprep.subr.bf16.mxu0 0
        %519 = vmatpush1.bf16.msra.mxu0 %v474
        %520 = vmatprep.subr.bf16.mxu0 0
        %521 = vmatpush1.bf16.msra.mxu0 %v475
        %522 = vmatprep.subr.bf16.mxu0 0
        %523 = vmatpush1.bf16.msra.mxu0 %v476
        %524 = vmatprep.subr.bf16.mxu0 0
        %525 = vmatpush1.bf16.msra.mxu0 %v477
        %526 = vmatprep.mubr.bf16.mxu0 %v351
        %527 = vmatmul.mubr.bf16.gmra.mrb[0].mxu0 %v350
        %v528 = vpop.f32.mrb[0].mxu0
        %v529 = vadd.f32 0.0, %v528
        %v530 = vpop.f32.mrb[0].mxu0
        %v531 = vpop.f32.mrb[0].mxu0
        %v532 = vadd.f32 0.0, %v531
        %v533 = vpop.f32.mrb[0].mxu0
        %534 = vmatprep.mubr.bf16.mxu0 %v353
        %535 = vmatmul.mubr.bf16.gmra.mrb[0].mxu0 %v352
        %v536 = vpop.f32.mrb[0].mxu0
        %v537 = vadd.f32 0.0, %v536
        %v538 = vpop.f32.mrb[0].mxu0
        %v539 = vpop.f32.mrb[0].mxu0
        %v540 = vadd.f32 0.0, %v539
        %v541 = vpop.f32.mrb[0].mxu0
        %542 = vmatprep.mubr.bf16.mxu0 %v355
        %543 = vmatmul.mubr.bf16.gmra.mrb[0].mxu0 %v354
        %v544 = vpop.f32.mrb[0].mxu0
        %v545 = vadd.f32 0.0, %v544
        %v546 = vpop.f32.mrb[0].mxu0
        %v547 = vpop.f32.mrb[0].mxu0
        %v548 = vadd.f32 0.0, %v547
        %v549 = vpop.f32.mrb[0].mxu0
        %550 = vmatprep.mubr.bf16.mxu0 %v357
        %551 = vmatmul.mubr.bf16.gmra.mrb[0].mxu0 %v356
        %v552 = vpop.f32.mrb[0].mxu0
        %v553 = vadd.f32 0.0, %v552
        %v554 = vpop.f32.mrb[0].mxu0
        %v555 = vpop.f32.mrb[0].mxu0
        %v556 = vadd.f32 0.0, %v555
        %v557 = vpop.f32.mrb[0].mxu0
        %558 = vmatprep.mubr.bf16.mxu0 %v359
        %559 = vmatmul.mubr.bf16.gmra.mrb[0].mxu0 %v358
        %v560 = vpop.f32.mrb[0].mxu0
        %v561 = vadd.f32 0.0, %v560
        %v562 = vpop.f32.mrb[0].mxu0
        %v563 = vpop.f32.mrb[0].mxu0
        %v564 = vadd.f32 0.0, %v563
        %v565 = vpop.f32.mrb[0].mxu0
        %566 = vmatprep.mubr.bf16.mxu0 %v361
        %567 = vmatmul.mubr.bf16.gmra.mrb[0].mxu0 %v360
        %v568 = vpop.f32.mrb[0].mxu0
        %v569 = vadd.f32 0.0, %v568
        %v570 = vpop.f32.mrb[0].mxu0
        %v571 = vpop.f32.mrb[0].mxu0
        %v572 = vadd.f32 0.0, %v571
        %v573 = vpop.f32.mrb[0].mxu0
        %574 = vmatprep.mubr.bf16.mxu0 %v363
        %575 = vmatmul.mubr.bf16.gmra.mrb[0].mxu0 %v362
        %v576 = vpop.f32.mrb[0].mxu0
        %v577 = vadd.f32 0.0, %v576
        %v578 = vpop.f32.mrb[0].mxu0
        %v579 = vpop.f32.mrb[0].mxu0
        %v580 = vadd.f32 0.0, %v579
        %v581 = vpop.f32.mrb[0].mxu0
        %582 = vmatprep.mubr.bf16.mxu0 %v365
        %583 = vmatmul.mubr.bf16.gmra.mrb[0].mxu0 %v364
        %v584 = vpop.f32.mrb[0].mxu0
        %v585 = vadd.f32 0.0, %v584
        %v586 = vpop.f32.mrb[0].mxu0
        %v587 = vpop.f32.mrb[0].mxu0
        %v588 = vadd.f32 0.0, %v587
        %v589 = vpop.f32.mrb[0].mxu0
        %590 = vdwg.mxu0
        %v591 = vld [vmem:[#allocation7] sm:$0xff]
        %v592 = vld [vmem:[#allocation7 + $0x8] sm:$0xff]
        %v593 = vld [vmem:[#allocation7 + $0x10] sm:$0xff]
        %v594 = vld [vmem:[#allocation7 + $0x18] sm:$0xff]
        %v595 = vld [vmem:[#allocation7 + $0x20] sm:$0xff]
        %v596 = vld [vmem:[#allocation7 + $0x28] sm:$0xff]
        %v597 = vld [vmem:[#allocation7 + $0x30] sm:$0xff]
        %v598 = vld [vmem:[#allocation7 + $0x38] sm:$0xff]
        %v599 = vld [vmem:[#allocation7 + $0x40] sm:$0xff]
        %v600 = vld [vmem:[#allocation7 + $0x48] sm:$0xff]
        %v601 = vld [vmem:[#allocation7 + $0x50] sm:$0xff]
        %v602 = vld [vmem:[#allocation7 + $0x58] sm:$0xff]
        %v603 = vld [vmem:[#allocation7 + $0x60] sm:$0xff]
        %v604 = vld [vmem:[#allocation7 + $0x68] sm:$0xff]
        %v605 = vld [vmem:[#allocation7 + $0x70] sm:$0xff]
        %v606 = vld [vmem:[#allocation7 + $0x78] sm:$0xff]
        %v607 = vld [vmem:[%s3] sm:$0x1]
        %v609 = vlaneseq
        %v610 = vshrl.u32 %v609, 7
        %v611 = vsub.s32 0, %v610
        %v612 = vrot.slane %v607, %v611
        %614 = vmatprep.subr.mxu0 0.0
        %615 = vmatpush1.msra.mxu0 %v591
        %616 = vmatprep.subr.mxu0 0.0
        %617 = vmatpush1.msra.mxu0 %v592
        %618 = vmatprep.subr.mxu0 0.0
        %619 = vmatpush1.msra.mxu0 %v593
        %620 = vmatprep.subr.mxu0 0.0
        %621 = vmatpush1.msra.mxu0 %v594
        %622 = vmatprep.subr.mxu0 0.0
        %623 = vmatpush1.msra.mxu0 %v595
        %624 = vmatprep.subr.mxu0 0.0
        %625 = vmatpush1.msra.mxu0 %v596
        %626 = vmatprep.subr.mxu0 0.0
        %627 = vmatpush1.msra.mxu0 %v597
        %628 = vmatprep.subr.mxu0 0.0
        %629 = vmatpush1.msra.mxu0 %v598
        %630 = vmatprep.subr.mxu0 0.0
        %631 = vmatpush1.msra.mxu0 %v599
        %632 = vmatprep.subr.mxu0 0.0
        %633 = vmatpush1.msra.mxu0 %v600
        %634 = vmatprep.subr.mxu0 0.0
        %635 = vmatpush1.msra.mxu0 %v601
        %636 = vmatprep.subr.mxu0 0.0
        %637 = vmatpush1.msra.mxu0 %v602
        %638 = vmatprep.subr.mxu0 0.0
        %639 = vmatpush1.msra.mxu0 %v603
        %640 = vmatprep.subr.mxu0 0.0
        %641 = vmatpush1.msra.mxu0 %v604
        %642 = vmatprep.subr.mxu0 0.0
        %643 = vmatpush1.msra.mxu0 %v605
        %644 = vmatprep.subr.mxu0 0.0
        %645 = vmatpush1.msra.mxu0 %v606
        %646 = vmatprep.subr.mxu0 0.0
        %647 = vmatpush1.msra.mxu0 0.0
        %648 = vmatprep.subr.mxu0 0.0
        %649 = vmatpush1.msra.mxu0 0.0
        %650 = vmatprep.subr.mxu0 0.0
        %651 = vmatpush1.msra.mxu0 0.0
        %652 = vmatprep.subr.mxu0 0.0
        %653 = vmatpush1.msra.mxu0 0.0
        %654 = vmatprep.subr.mxu0 0.0
        %655 = vmatpush1.msra.mxu0 0.0
        %656 = vmatprep.subr.mxu0 0.0
        %657 = vmatpush1.msra.mxu0 0.0
        %658 = vmatprep.subr.mxu0 0.0
        %659 = vmatpush1.msra.mxu0 0.0
        %660 = vmatprep.subr.mxu0 0.0
        %661 = vmatpush1.msra.mxu0 0.0
        %662 = vmatprep.subr.mxu0 0.0
        %663 = vmatpush1.msra.mxu0 0.0
        %664 = vmatprep.subr.mxu0 0.0
        %665 = vmatpush1.msra.mxu0 0.0
        %666 = vmatprep.subr.mxu0 0.0
        %667 = vmatpush1.msra.mxu0 0.0
        %668 = vmatprep.subr.mxu0 0.0
        %669 = vmatpush1.msra.mxu0 0.0
        %670 = vmatprep.subr.mxu0 0.0
        %671 = vmatpush1.msra.mxu0 0.0
        %672 = vmatprep.subr.mxu0 0.0
        %673 = vmatpush1.msra.mxu0 0.0
        %674 = vmatprep.subr.mxu0 0.0
        %675 = vmatpush1.msra.mxu0 0.0
        %676 = vmatprep.subr.mxu0 0.0
        %677 = vmatpush1.msra.mxu0 0.0
        %678 = vmatprep.mubr.f32.mxu0 0.0
        %679 = vmatmul.mubr.f32.gmra.mrb[0].mxu0 %v529
        %v680 = vpop.f32.mrb[0].mxu0
        %v681 = vadd.f32 %v612, %v680
        %v682 = vpop.f32.mrb[0].mxu0
        %683 = vmatprep.mubr.f32.mxu0 0.0
        %684 = vmatmul.mubr.f32.gmra.mrb[0].mxu0 %v532
        %v685 = vpop.f32.mrb[0].mxu0
        %v686 = vadd.f32 %v612, %v685
        %v687 = vpop.f32.mrb[0].mxu0
        %688 = vmatprep.mubr.f32.mxu0 0.0
        %689 = vmatmul.mubr.f32.gmra.mrb[0].mxu0 %v537
        %v690 = vpop.f32.mrb[0].mxu0
        %v691 = vadd.f32 %v612, %v690
        %v692 = vpop.f32.mrb[0].mxu0
        %693 = vmatprep.mubr.f32.mxu0 0.0
        %694 = vmatmul.mubr.f32.gmra.mrb[0].mxu0 %v540
        %v695 = vpop.f32.mrb[0].mxu0
        %v696 = vadd.f32 %v612, %v695
        %v697 = vpop.f32.mrb[0].mxu0
        %698 = vmatprep.mubr.f32.mxu0 0.0
        %699 = vmatmul.mubr.f32.gmra.mrb[0].mxu0 %v545
        %v700 = vpop.f32.mrb[0].mxu0
        %v701 = vadd.f32 %v612, %v700
        %v702 = vpop.f32.mrb[0].mxu0
        %703 = vmatprep.mubr.f32.mxu0 0.0
        %704 = vmatmul.mubr.f32.gmra.mrb[0].mxu0 %v548
        %v705 = vpop.f32.mrb[0].mxu0
        %v706 = vadd.f32 %v612, %v705
        %v707 = vpop.f32.mrb[0].mxu0
        %708 = vmatprep.mubr.f32.mxu0 0.0
        %709 = vmatmul.mubr.f32.gmra.mrb[0].mxu0 %v553
        %v710 = vpop.f32.mrb[0].mxu0
        %v711 = vadd.f32 %v612, %v710
        %v712 = vpop.f32.mrb[0].mxu0
        %713 = vmatprep.mubr.f32.mxu0 0.0
        %714 = vmatmul.mubr.f32.gmra.mrb[0].mxu0 %v556
        %v715 = vpop.f32.mrb[0].mxu0
        %v716 = vadd.f32 %v612, %v715
        %v717 = vpop.f32.mrb[0].mxu0
        %718 = vmatprep.mubr.f32.mxu0 0.0
        %719 = vmatmul.mubr.f32.gmra.mrb[0].mxu0 %v561
        %v720 = vpop.f32.mrb[0].mxu0
        %v721 = vadd.f32 %v612, %v720
        %v722 = vpop.f32.mrb[0].mxu0
        %723 = vmatprep.mubr.f32.mxu0 0.0
        %724 = vmatmul.mubr.f32.gmra.mrb[0].mxu0 %v564
        %v725 = vpop.f32.mrb[0].mxu0
        %v726 = vadd.f32 %v612, %v725
        %v727 = vpop.f32.mrb[0].mxu0
        %728 = vmatprep.mubr.f32.mxu0 0.0
        %729 = vmatmul.mubr.f32.gmra.mrb[0].mxu0 %v569
        %v730 = vpop.f32.mrb[0].mxu0
        %v731 = vadd.f32 %v612, %v730
        %v732 = vpop.f32.mrb[0].mxu0
        %733 = vmatprep.mubr.f32.mxu0 0.0
        %734 = vmatmul.mubr.f32.gmra.mrb[0].mxu0 %v572
        %v735 = vpop.f32.mrb[0].mxu0
        %v736 = vadd.f32 %v612, %v735
        %v737 = vpop.f32.mrb[0].mxu0
        %738 = vmatprep.mubr.f32.mxu0 0.0
        %739 = vmatmul.mubr.f32.gmra.mrb[0].mxu0 %v577
        %v740 = vpop.f32.mrb[0].mxu0
        %v741 = vadd.f32 %v612, %v740
        %v742 = vpop.f32.mrb[0].mxu0
        %743 = vmatprep.mubr.f32.mxu0 0.0
        %744 = vmatmul.mubr.f32.gmra.mrb[0].mxu0 %v580
        %v745 = vpop.f32.mrb[0].mxu0
        %v746 = vadd.f32 %v612, %v745
        %v747 = vpop.f32.mrb[0].mxu0
        %748 = vmatprep.mubr.f32.mxu0 0.0
        %749 = vmatmul.mubr.f32.gmra.mrb[0].mxu0 %v585
        %v750 = vpop.f32.mrb[0].mxu0
        %v751 = vadd.f32 %v612, %v750
        %v752 = vpop.f32.mrb[0].mxu0
        %753 = vmatprep.mubr.f32.mxu0 0.0
        %754 = vmatmul.mubr.f32.gmra.mrb[0].mxu0 %v588
        %v755 = vpop.f32.mrb[0].mxu0
        %v756 = vadd.f32 %v612, %v755
        %v757 = vpop.f32.mrb[0].mxu0
        %758 = vdwg.mxu0
        %v759 = vmax.f32 %v681, 0.0
        %v760 = vmax.f32 %v686, 0.0
        %v761 = vmax.f32 %v691, 0.0
        %v762 = vmax.f32 %v696, 0.0
        %v763 = vmax.f32 %v701, 0.0
        %v764 = vmax.f32 %v706, 0.0
        %v765 = vmax.f32 %v711, 0.0
        %v766 = vmax.f32 %v716, 0.0
        %v767 = vmax.f32 %v721, 0.0
        %v768 = vmax.f32 %v726, 0.0
        %v769 = vmax.f32 %v731, 0.0
        %v770 = vmax.f32 %v736, 0.0
        %v771 = vmax.f32 %v741, 0.0
        %v772 = vmax.f32 %v746, 0.0
        %v773 = vmax.f32 %v751, 0.0
        %v774 = vmax.f32 %v756, 0.0
        %v775 = vld [vmem:[#allocation8] sm:$0xff]
        %v776 = vld [vmem:[#allocation8 + $0x8] sm:$0xff]
        %v777 = vld [vmem:[#allocation8 + $0x10] sm:$0xff]
        %v778 = vld [vmem:[#allocation8 + $0x18] sm:$0xff]
        %v779 = vld [vmem:[#allocation8 + $0x20] sm:$0xff]
        %v780 = vld [vmem:[#allocation8 + $0x28] sm:$0xff]
        %v781 = vld [vmem:[#allocation8 + $0x30] sm:$0xff]
        %v782 = vld [vmem:[#allocation8 + $0x38] sm:$0xff]
        %v783 = vld [vmem:[#allocation8 + $0x40] sm:$0xff]
        %v784 = vld [vmem:[#allocation8 + $0x48] sm:$0xff]
        %v785 = vld [vmem:[#allocation8 + $0x50] sm:$0xff]
        %v786 = vld [vmem:[#allocation8 + $0x58] sm:$0xff]
        %v787 = vld [vmem:[#allocation8 + $0x60] sm:$0xff]
        %v788 = vld [vmem:[#allocation8 + $0x68] sm:$0xff]
        %v789 = vld [vmem:[#allocation8 + $0x70] sm:$0xff]
        %v790 = vld [vmem:[#allocation8 + $0x78] sm:$0xff]
        %v791 = vld [vmem:[%s5] sm:$0x1]
        %v793 = vlaneseq
        %v794 = vshrl.u32 %v793, 7
        %v795 = vsub.s32 0, %v794
        %v796 = vrot.slane %v791, %v795
        %798 = vmatprep.subr.mxu0 0.0
        %799 = vmatpush1.msra.mxu0 %v775
        %800 = vmatprep.subr.mxu0 0.0
        %801 = vmatpush1.msra.mxu0 %v776
        %802 = vmatprep.subr.mxu0 0.0
        %803 = vmatpush1.msra.mxu0 %v777
        %804 = vmatprep.subr.mxu0 0.0
        %805 = vmatpush1.msra.mxu0 %v778
        %806 = vmatprep.subr.mxu0 0.0
        %807 = vmatpush1.msra.mxu0 %v779
        %808 = vmatprep.subr.mxu0 0.0
        %809 = vmatpush1.msra.mxu0 %v780
        %810 = vmatprep.subr.mxu0 0.0
        %811 = vmatpush1.msra.mxu0 %v781
        %812 = vmatprep.subr.mxu0 0.0
        %813 = vmatpush1.msra.mxu0 %v782
        %814 = vmatprep.subr.mxu0 0.0
        %815 = vmatpush1.msra.mxu0 %v783
        %816 = vmatprep.subr.mxu0 0.0
        %817 = vmatpush1.msra.mxu0 %v784
        %818 = vmatprep.subr.mxu0 0.0
        %819 = vmatpush1.msra.mxu0 %v785
        %820 = vmatprep.subr.mxu0 0.0
        %821 = vmatpush1.msra.mxu0 %v786
        %822 = vmatprep.subr.mxu0 0.0
        %823 = vmatpush1.msra.mxu0 %v787
        %824 = vmatprep.subr.mxu0 0.0
        %825 = vmatpush1.msra.mxu0 %v788
        %826 = vmatprep.subr.mxu0 0.0
        %827 = vmatpush1.msra.mxu0 %v789
        %828 = vmatprep.subr.mxu0 0.0
        %829 = vmatpush1.msra.mxu0 %v790
        %830 = vmatprep.subr.mxu0 0.0
        %831 = vmatpush1.msra.mxu0 0.0
        %832 = vmatprep.subr.mxu0 0.0
        %833 = vmatpush1.msra.mxu0 0.0
        %834 = vmatprep.subr.mxu0 0.0
        %835 = vmatpush1.msra.mxu0 0.0
        %836 = vmatprep.subr.mxu0 0.0
        %837 = vmatpush1.msra.mxu0 0.0
        %838 = vmatprep.subr.mxu0 0.0
        %839 = vmatpush1.msra.mxu0 0.0
        %840 = vmatprep.subr.mxu0 0.0
        %841 = vmatpush1.msra.mxu0 0.0
        %842 = vmatprep.subr.mxu0 0.0
        %843 = vmatpush1.msra.mxu0 0.0
        %844 = vmatprep.subr.mxu0 0.0
        %845 = vmatpush1.msra.mxu0 0.0
        %846 = vmatprep.subr.mxu0 0.0
        %847 = vmatpush1.msra.mxu0 0.0
        %848 = vmatprep.subr.mxu0 0.0
        %849 = vmatpush1.msra.mxu0 0.0
        %850 = vmatprep.subr.mxu0 0.0
        %851 = vmatpush1.msra.mxu0 0.0
        %852 = vmatprep.subr.mxu0 0.0
        %853 = vmatpush1.msra.mxu0 0.0
        %854 = vmatprep.subr.mxu0 0.0
        %855 = vmatpush1.msra.mxu0 0.0
        %856 = vmatprep.subr.mxu0 0.0
        %857 = vmatpush1.msra.mxu0 0.0
        %858 = vmatprep.subr.mxu0 0.0
        %859 = vmatpush1.msra.mxu0 0.0
        %860 = vmatprep.subr.mxu0 0.0
        %861 = vmatpush1.msra.mxu0 0.0
        %862 = vmatprep.mubr.f32.mxu0 0.0
        %863 = vmatmul.mubr.f32.gmra.mrb[0].mxu0 %v759
        %v864 = vpop.f32.mrb[0].mxu0
        %v865 = vadd.f32 %v796, %v864
        %v866 = vpop.f32.mrb[0].mxu0
        %867 = vmatprep.mubr.f32.mxu0 0.0
        %868 = vmatmul.mubr.f32.gmra.mrb[0].mxu0 %v760
        %v869 = vpop.f32.mrb[0].mxu0
        %v870 = vadd.f32 %v796, %v869
        %v871 = vpop.f32.mrb[0].mxu0
        %872 = vmatprep.mubr.f32.mxu0 0.0
        %873 = vmatmul.mubr.f32.gmra.mrb[0].mxu0 %v761
        %v874 = vpop.f32.mrb[0].mxu0
        %v875 = vadd.f32 %v796, %v874
        %v876 = vpop.f32.mrb[0].mxu0
        %877 = vmatprep.mubr.f32.mxu0 0.0
        %878 = vmatmul.mubr.f32.gmra.mrb[0].mxu0 %v762
        %v879 = vpop.f32.mrb[0].mxu0
        %v880 = vadd.f32 %v796, %v879
        %v881 = vpop.f32.mrb[0].mxu0
        %882 = vmatprep.mubr.f32.mxu0 0.0
        %883 = vmatmul.mubr.f32.gmra.mrb[0].mxu0 %v763
        %v884 = vpop.f32.mrb[0].mxu0
        %v885 = vadd.f32 %v796, %v884
        %v886 = vpop.f32.mrb[0].mxu0
        %887 = vmatprep.mubr.f32.mxu0 0.0
        %888 = vmatmul.mubr.f32.gmra.mrb[0].mxu0 %v764
        %v889 = vpop.f32.mrb[0].mxu0
        %v890 = vadd.f32 %v796, %v889
        %v891 = vpop.f32.mrb[0].mxu0
        %892 = vmatprep.mubr.f32.mxu0 0.0
        %893 = vmatmul.mubr.f32.gmra.mrb[0].mxu0 %v765
        %v894 = vpop.f32.mrb[0].mxu0
        %v895 = vadd.f32 %v796, %v894
        %v896 = vpop.f32.mrb[0].mxu0
        %897 = vmatprep.mubr.f32.mxu0 0.0
        %898 = vmatmul.mubr.f32.gmra.mrb[0].mxu0 %v766
        %v899 = vpop.f32.mrb[0].mxu0
        %v900 = vadd.f32 %v796, %v899
        %v901 = vpop.f32.mrb[0].mxu0
        %902 = vmatprep.mubr.f32.mxu0 0.0
        %903 = vmatmul.mubr.f32.gmra.mrb[0].mxu0 %v767
        %v904 = vpop.f32.mrb[0].mxu0
        %v905 = vadd.f32 %v796, %v904
        %v906 = vpop.f32.mrb[0].mxu0
        %907 = vmatprep.mubr.f32.mxu0 0.0
        %908 = vmatmul.mubr.f32.gmra.mrb[0].mxu0 %v768
        %v909 = vpop.f32.mrb[0].mxu0
        %v910 = vadd.f32 %v796, %v909
        %v911 = vpop.f32.mrb[0].mxu0
        %912 = vmatprep.mubr.f32.mxu0 0.0
        %913 = vmatmul.mubr.f32.gmra.mrb[0].mxu0 %v769
        %v914 = vpop.f32.mrb[0].mxu0
        %v915 = vadd.f32 %v796, %v914
        %v916 = vpop.f32.mrb[0].mxu0
        %917 = vmatprep.mubr.f32.mxu0 0.0
        %918 = vmatmul.mubr.f32.gmra.mrb[0].mxu0 %v770
        %v919 = vpop.f32.mrb[0].mxu0
        %v920 = vadd.f32 %v796, %v919
        %v921 = vpop.f32.mrb[0].mxu0
        %922 = vmatprep.mubr.f32.mxu0 0.0
        %923 = vmatmul.mubr.f32.gmra.mrb[0].mxu0 %v771
        %v924 = vpop.f32.mrb[0].mxu0
        %v925 = vadd.f32 %v796, %v924
        %v926 = vpop.f32.mrb[0].mxu0
        %927 = vmatprep.mubr.f32.mxu0 0.0
        %928 = vmatmul.mubr.f32.gmra.mrb[0].mxu0 %v772
        %v929 = vpop.f32.mrb[0].mxu0
        %v930 = vadd.f32 %v796, %v929
        %v931 = vpop.f32.mrb[0].mxu0
        %932 = vmatprep.mubr.f32.mxu0 0.0
        %933 = vmatmul.mubr.f32.gmra.mrb[0].mxu0 %v773
        %v934 = vpop.f32.mrb[0].mxu0
        %v935 = vadd.f32 %v796, %v934
        %v936 = vpop.f32.mrb[0].mxu0
        %937 = vmatprep.mubr.f32.mxu0 0.0
        %938 = vmatmul.mubr.f32.gmra.mrb[0].mxu0 %v774
        %v939 = vpop.f32.mrb[0].mxu0
        %v940 = vadd.f32 %v796, %v939
        %v941 = vpop.f32.mrb[0].mxu0
        %942 = vdwg.mxu0
        %943 = vst [vmem:[%s314] sm:$0xff] %v865
        %944 = vst [vmem:[%s314 + $0x8] sm:$0xff] %v870
        %945 = vst [vmem:[%s314 + $0x10] sm:$0xff] %v875
        %946 = vst [vmem:[%s314 + $0x18] sm:$0xff] %v880
        %947 = vst [vmem:[%s314 + $0x20] sm:$0xff] %v885
        %948 = vst [vmem:[%s314 + $0x28] sm:$0xff] %v890
        %949 = vst [vmem:[%s314 + $0x30] sm:$0xff] %v895
        %950 = vst [vmem:[%s314 + $0x38] sm:$0xff] %v900
        %951 = vst [vmem:[%s314 + $0x40] sm:$0xff] %v905
        %952 = vst [vmem:[%s314 + $0x48] sm:$0xff] %v910
        %953 = vst [vmem:[%s314 + $0x50] sm:$0xff] %v915
        %954 = vst [vmem:[%s314 + $0x58] sm:$0xff] %v920
        %955 = vst [vmem:[%s314 + $0x60] sm:$0xff] %v925
        %956 = vst [vmem:[%s314 + $0x68] sm:$0xff] %v930
        %957 = vst [vmem:[%s314 + $0x70] sm:$0xff] %v935
        %958 = vst [vmem:[%s314 + $0x78] sm:$0xff] %v940
        %s959 = sand.u32 %s164, 1
        %s960 = scalar_lea.sflag [#allocation4], %s959
        %s961 = sand.u32 %s164, 1
        %s962 = smul.addr %s961, 128
        %s963 = scalar_lea.vmem [#allocation10], %s962
        // Predicated region
        $region61: #{tpu_custom_call.1} parent=43 // pred_check
          %p964 = pneg %p174
        $region62: #{tpu_custom_call.1} parent=43 // pred_check_branch
          %966 = sbr.rel (%p964) target = $region64
        $region63: #{tpu_custom_call.1} parent=43 // pred_region
          %s967 = smul.u32 16, %s25
          %s969 = ssub.s32 2048, 2048
          %970 = vsyncadd %s960, %s969
          %s971 = smul.addr %s967, 128
          %s972 = scalar_lea.hbm %s6, %s971
          %s973 = sshll.u32 %s963, 4
          %s974 = int_to_ptr.vmem [resolvable:$true] %s973
          %979 = dma.vmem_to_hbm [thread:$0]  %s974, 2048, %s972, %s960, 128, 128, 8
        $region64: #{tpu_custom_call.1} parent=43 // pred_fallthru
          _
      $region44: #{tpu_custom_call.1} parent=5 // pred_fallthru
        _
      %p980 = scmp.le.s32.totalorder 2, %s20
      // Predicated region
      $region65: #{tpu_custom_call.1} parent=5 // pred_check
        %p981 = pneg %p980
      $region66: #{tpu_custom_call.1} parent=5 // pred_check_branch
        %983 = sbr.rel (%p981) target = $region68
      $region67: #{tpu_custom_call.1} parent=5 // pred_region
        %s984 = ssub.s32 %s20, 2
        // Predicated region
        $region69: #{tpu_custom_call.1} parent=67 // pred_check
          %p985 = pneg %p180
        $region70: #{tpu_custom_call.1} parent=67 // pred_check_branch
          %987 = sbr.rel (%p985) target = $region72
        $region71: #{tpu_custom_call.1} parent=67 // pred_region
          %s988 = sand.u32 %s165, 1
          %s989 = scalar_lea.sflag [#allocation4], %s988
          %s990 = sand.u32 %s165, 1
          %s991 = smul.addr %s990, 128
          %s992 = scalar_lea.vmem [#allocation10], %s991
          %993 = dma.done %s989, 2048
        $region72: #{tpu_custom_call.1} parent=67 // pred_fallthru
          _
      $region68: #{tpu_custom_call.1} parent=5 // pred_fallthru
        _
    $region6: #{tpu_custom_call.1} parent=1 // loop_footer
      %s24 = sadd.s32 1, %s20
    $region7: #{tpu_custom_call.1} parent=1 // loop_footer_branch
      %19 = sbr.rel target = $region3
    $region8: #{tpu_custom_call.1} parent=1 // loop_exit
      _
    %994 = vsyncpa [#allocation3], 1
    %s995 = scalar_lea.sflag [#allocation3], 1
    %996 = vsyncpa %s995, 1
    %997 = vsyncpa [#allocation6], 1
    %998 = vsyncpa [#allocation9], 1
    %999 = vsyncpa [#allocation4], 1
    %s1000 = scalar_lea.sflag [#allocation4], 1
    %1001 = vsyncpa %s1000, 1

</llo_original>
